<compile_context>
chip_gen: v5e
topology: v5e:2x2
jax: 0.10.0
libtpu: 0.0.40
codegen_flags: <defaults>
</compile_context>

<pallas_src>
import jax
import jax.numpy as jnp
from jax.experimental import pallas as pl
from jax.experimental.pallas import tpu as pltpu


def _reslora_kernel(x_ref, w_ref, xa_ref, b_ref, bias_ref, o_ref, acc_ref):
    """One (tm, tn) output tile, accumulated over the k (d_in) grid axis.

        k == 0 : acc  = bias                      (broadcast init)
        every k: acc += x_k @ Wt_k                (frozen base linear)
        last k : o    = acc + xa @ Bcat           (LoRA up-proj; scaling folded
                                                   into Bcat, xa precomputed)
    """
    k = pl.program_id(2)

    @pl.when(k == 0)
    def _():
        acc_ref[...] = jnp.broadcast_to(bias_ref[...], acc_ref.shape)

    acc_ref[...] += jnp.dot(x_ref[...], w_ref[...],
                            preferred_element_type=jnp.float32)

    @pl.when(k == pl.num_programs(2) - 1)
    def _():
        lora = jnp.dot(xa_ref[...], b_ref[...],
                       preferred_element_type=jnp.float32)
        o_ref[...] = (acc_ref[...] + lora).astype(o_ref.dtype)


def _round_up(x, m):
    return ((x + m - 1) // m) * m


def _pad2(arr, rows, cols):
    r, c = arr.shape
    if r == rows and c == cols:
        return arr
    return jnp.pad(arr, ((0, rows - r), (0, cols - c)))


def reslora_linear(x2d, w, a, b, bias, *, scaling,
                   a_prev=None, b_prev=None,
                   tm=256, tn=512, tk=1024,
                   matmul_dtype=None, vmem_limit_bytes=None):
    """x2d: (tokens, d_in).  w: (d_out, d_in) PyTorch convention.
    a: (rank, d_in), b: (d_out, rank), bias: (d_out,).
    a_prev/b_prev: previous linked block's LoRA (ResLoRA residual), or None.
    Returns (tokens, d_out) in x2d.dtype."""
    tokens, d_in = x2d.shape
    d_out, _ = w.shape
    has_prev = (a_prev is not None) and (b_prev is not None)
    if matmul_dtype is None:
        matmul_dtype = x2d.dtype
    matmul_dtype = jnp.dtype(matmul_dtype)

    # ---- one-time weight / activation prep (outside the kernel hot loop) ----
    w_t = w.T.astype(matmul_dtype)                        # (d_in, d_out)
    if has_prev:
        a_cat = jnp.concatenate([a, a_prev], axis=0)      # (2r, d_in)
        b_cat = jnp.concatenate([b, b_prev], axis=1)      # (d_out, 2r)
    else:
        a_cat, b_cat = a, b
    a_cat_t = a_cat.T.astype(matmul_dtype)                # (d_in, r_tot)
    b_cat_t = (b_cat.T * scaling).astype(matmul_dtype)    # (r_tot, d_out), scale folded
    r_tot = a_cat_t.shape[1]
    bias2d = bias.reshape(1, d_out).astype(jnp.float32)

    # Wrapper-side cast (halves x HBM traffic for bf16; no in-kernel VPU cast).
    x_c = x2d.astype(matmul_dtype)

    # Hoisted LoRA down-projection: one tiny XLA matmul instead of a per-(j,k)
    # rank-r MXU push inside the kernel.
    xa = jnp.dot(x_c, a_cat_t,
                 preferred_element_type=jnp.float32).astype(matmul_dtype)

    # ---- tile selection + zero padding --------------------------------------
    row_align = {4: 8, 2: 16, 1: 32}.get(matmul_dtype.itemsize, 8)
    tm = min(tm, _round_up(tokens, row_align))
    tokens_p = _round_up(tokens, tm)

    if d_out <= 128:
        tn, d_out_p = d_out, d_out                         # full-extent lane dim
    else:
        tn = min(tn, _round_up(d_out, 128))
        d_out_p = _round_up(d_out, tn)

    if d_in <= 128:
        tk, d_in_p = d_in, d_in
    else:
        tk = min(tk, _round_up(d_in, 128))
        d_in_p = _round_up(d_in, tk)

    # v7x megacore: if the grid has a single parallel block, split the j axis
    # so both TensorCores get work (no-op on v5e/v6e).
    if tokens_p // tm == 1 and d_out_p // tn == 1 and tn % 256 == 0:
        tn //= 2

    x_p    = _pad2(x_c,     tokens_p, d_in_p)
    xa_p   = _pad2(xa,      tokens_p, r_tot)
    w_p    = _pad2(w_t,     d_in_p,   d_out_p)
    b_p    = _pad2(b_cat_t, r_tot,    d_out_p)
    bias_p = _pad2(bias2d,  1,        d_out_p)

    grid = (tokens_p // tm, d_out_p // tn, d_in_p // tk)

    grid_spec = pltpu.PrefetchScalarGridSpec(
        num_scalar_prefetch=0,
        grid=grid,
        in_specs=[
            pl.BlockSpec((tm, tk),    lambda i, j, k: (i, k)),  # x tile
            pl.BlockSpec((tk, tn),    lambda i, j, k: (k, j)),  # W^T tile
            pl.BlockSpec((tm, r_tot), lambda i, j, k: (i, 0)),  # x@A_cat (resident over j,k)
            pl.BlockSpec((r_tot, tn), lambda i, j, k: (0, j)),  # scaled B_cat^T tile
            pl.BlockSpec((1, tn),     lambda i, j, k: (0, j)),  # bias tile
        ],
        out_specs=pl.BlockSpec((tm, tn), lambda i, j, k: (i, j)),
        scratch_shapes=[
            pltpu.VMEM((tm, tn), jnp.float32),   # f32 accumulator
        ],
    )

    cp_kwargs = dict(dimension_semantics=("parallel", "parallel", "arbitrary"))
    if vmem_limit_bytes is not None:
        cp_kwargs["vmem_limit_bytes"] = vmem_limit_bytes

    out_p = pl.pallas_call(
        _reslora_kernel,
        grid_spec=grid_spec,
        out_shape=jax.ShapeDtypeStruct((tokens_p, d_out_p), x2d.dtype),
        compiler_params=pltpu.CompilerParams(**cp_kwargs),
    )(x_p, w_p, xa_p, b_p, bias_p)

    if tokens_p != tokens or d_out_p != d_out:
        out_p = out_p[:tokens, :d_out]
    return out_p


def reslora_linear_ref(x2d, w, a, b, bias, scaling, a_prev=None, b_prev=None):
    y = x2d @ w.T + bias[None, :]
    y = y + scaling * (x2d @ a.T) @ b.T
    if a_prev is not None:
        y = y + scaling * (x2d @ a_prev.T) @ b_prev.T
    return y


if __name__ == "__main__":
    # Small shapes implied by the module: a stack of same-shape target linears
    # (e.g. q_proj of consecutive transformer layers) linked by concat_loras().
    batch, seq, hidden, rank = 2, 8, 32, 4
    lora_alpha = 8
    scaling = lora_alpha / rank

    key = jax.random.PRNGKey(0)
    keys = jax.random.split(key, 8)

    x = jax.random.normal(keys[0], (batch, seq, hidden), dtype=jnp.float32)

    # Layer 0 (number=0, pre_lora=None) and layer 1 (number=1, pre_lora=layer0).
    w0 = jax.random.normal(keys[1], (hidden, hidden), dtype=jnp.float32) * 0.05
    w1 = jax.random.normal(keys[2], (hidden, hidden), dtype=jnp.float32) * 0.05
    a0 = jax.random.normal(keys[3], (rank, hidden), dtype=jnp.float32) * 0.1
    b0 = jax.random.normal(keys[4], (hidden, rank), dtype=jnp.float32) * 0.1
    a1 = jax.random.normal(keys[5], (rank, hidden), dtype=jnp.float32) * 0.1
    b1 = jax.random.normal(keys[6], (hidden, rank), dtype=jnp.float32) * 0.1
    bias0 = jax.random.normal(keys[7], (hidden,), dtype=jnp.float32) * 0.01
    bias1 = jnp.zeros((hidden,), dtype=jnp.float32)

    x2d = x.reshape(batch * seq, hidden)

    # Chain both layers under one jit so the intermediate stays on-device.
    @jax.jit
    def two_layer_chain(x2d, w0, a0, b0, bias0, w1, a1, b1, bias1):
        # Layer 0: no pre_lora (statically specialized — no residual inputs).
        y0 = reslora_linear(x2d, w0, a0, b0, bias0, scaling=scaling)
        # Layer 1: pre_lora = layer 0 (same in/out features -> linked).
        y1 = reslora_linear(y0, w1, a1, b1, bias1,
                            a_prev=a0, b_prev=b0, scaling=scaling)
        return y1

    y1 = jax.block_until_ready(
        two_layer_chain(x2d, w0, a0, b0, bias0, w1, a1, b1, bias1))
    out = y1.reshape(batch, seq, hidden)

    # Sanity check against a plain-JAX reference of the same semantics.
    r0 = reslora_linear_ref(x2d, w0, a0, b0, bias0, scaling)
    r1 = reslora_linear_ref(r0, w1, a1, b1, bias1, scaling, a_prev=a0, b_prev=b0)
    assert jnp.allclose(y1, r1, atol=1e-4, rtol=1e-4), "mismatch vs reference"
    assert out.shape == (batch, seq, hidden)

    print("KERNEL_OK")
</pallas_src>

<mosaic_0001>
module attributes {stable_mosaic.version = 11 : i64} {
  func.func @_reslora_kernel(%arg0: i32, %arg1: i32, %arg2: i32, %arg3: memref<16x32xf32, #tpu.memory_space<vmem>>, %arg4: memref<32x32xf32, #tpu.memory_space<vmem>>, %arg5: memref<16x8xf32, #tpu.memory_space<vmem>>, %arg6: memref<8x32xf32, #tpu.memory_space<vmem>>, %arg7: memref<1x32xf32, #tpu.memory_space<vmem>>, %arg8: memref<16x32xf32, #tpu.memory_space<vmem>>, %arg9: memref<16x32xf32, #tpu.memory_space<vmem>>) attributes {dimension_semantics = [#tpu.dimension_semantics<parallel>, #tpu.dimension_semantics<parallel>, #tpu.dimension_semantics<arbitrary>], iteration_bounds = array<i64: 1, 1, 1>, scalar_prefetch = 0 : i64, scratch_operands = 1 : i64, tpu.core_type = #tpu.core_type<tc>, window_params = [{transform_indices = @transform_0, window_bounds = array<i64: 16, 32>}, {transform_indices = @transform_1, window_bounds = array<i64: 32, 32>}, {transform_indices = @transform_2, window_bounds = array<i64: 16, 8>}, {transform_indices = @transform_3, window_bounds = array<i64: 8, 32>}, {transform_indices = @transform_4, window_bounds = array<i64: 1, 32>}, {transform_indices = @transform_5, window_bounds = array<i64: 16, 32>}]} {
    %c0_i32 = arith.constant 0 : i32
    %0 = arith.cmpi eq, %arg2, %c0_i32 : i32
    %1 = arith.extui %0 : i1 to i32
    %c0_i32_0 = arith.constant 0 : i32
    %2 = arith.cmpi ne, %1, %c0_i32_0 : i32
    scf.if %2 {
      %c0_10 = arith.constant 0 : index
      %c0_11 = arith.constant 0 : index
      %12 = vector.load %arg7[%c0_10, %c0_11] : memref<1x32xf32, #tpu.memory_space<vmem>>, vector<1x32xf32>
      %13 = vector.shape_cast %12 : vector<1x32xf32> to vector<1x32xf32>
      %14 = vector.broadcast %13 : vector<1x32xf32> to vector<16x32xf32>
      %c0_12 = arith.constant 0 : index
      %c0_13 = arith.constant 0 : index
      %15 = vector.load %arg9[%c0_12, %c0_13] : memref<16x32xf32, #tpu.memory_space<vmem>>, vector<16x32xf32>
      tpu.vector_store %arg9[%c0_12, %c0_13], %14 {strides = array<i32>} : memref<16x32xf32, #tpu.memory_space<vmem>>, vector<16x32xf32>,
    } else {
    }
    %c0 = arith.constant 0 : index
    %c0_1 = arith.constant 0 : index
    %3 = vector.load %arg9[%c0, %c0_1] : memref<16x32xf32, #tpu.memory_space<vmem>>, vector<16x32xf32>
    %c0_2 = arith.constant 0 : index
    %c0_3 = arith.constant 0 : index
    %4 = vector.load %arg3[%c0_2, %c0_3] : memref<16x32xf32, #tpu.memory_space<vmem>>, vector<16x32xf32>
    %c0_4 = arith.constant 0 : index
    %c0_5 = arith.constant 0 : index
    %5 = vector.load %arg4[%c0_4, %c0_5] : memref<32x32xf32, #tpu.memory_space<vmem>>, vector<32x32xf32>
    %cst = arith.constant dense<0.000000e+00> : vector<16x32xf32>
    %6 = tpu.matmul %4, %5, %cst {dimension_numbers = #tpu.dot_dimension_numbers<[1], [0], [0], [1], [0, 0, 1, 1], [], []>} : vector<16x32xf32>, vector<32x32xf32>, vector<16x32xf32> -> vector<16x32xf32>
    %7 = arith.addf %3, %6 : vector<16x32xf32>
    %c0_6 = arith.constant 0 : index
    %c0_7 = arith.constant 0 : index
    %8 = vector.load %arg9[%c0_6, %c0_7] : memref<16x32xf32, #tpu.memory_space<vmem>>, vector<16x32xf32>
    tpu.vector_store %arg9[%c0_6, %c0_7], %7 {strides = array<i32>} : memref<16x32xf32, #tpu.memory_space<vmem>>, vector<16x32xf32>,
    %c0_i32_8 = arith.constant 0 : i32
    %9 = arith.cmpi eq, %arg2, %c0_i32_8 : i32
    %10 = arith.extui %9 : i1 to i32
    %c0_i32_9 = arith.constant 0 : i32
    %11 = arith.cmpi ne, %10, %c0_i32_9 : i32
    scf.if %11 {
      %c0_10 = arith.constant 0 : index
      %c0_11 = arith.constant 0 : index
      %12 = vector.load %arg5[%c0_10, %c0_11] : memref<16x8xf32, #tpu.memory_space<vmem>>, vector<16x8xf32>
      %c0_12 = arith.constant 0 : index
      %c0_13 = arith.constant 0 : index
      %13 = vector.load %arg6[%c0_12, %c0_13] : memref<8x32xf32, #tpu.memory_space<vmem>>, vector<8x32xf32>
      %cst_14 = arith.constant dense<0.000000e+00> : vector<16x32xf32>
      %14 = tpu.matmul %12, %13, %cst_14 {dimension_numbers = #tpu.dot_dimension_numbers<[1], [0], [0], [1], [0, 0, 1, 1], [], []>} : vector<16x8xf32>, vector<8x32xf32>, vector<16x32xf32> -> vector<16x32xf32>
      %c0_15 = arith.constant 0 : index
      %c0_16 = arith.constant 0 : index
      %15 = vector.load %arg9[%c0_15, %c0_16] : memref<16x32xf32, #tpu.memory_space<vmem>>, vector<16x32xf32>
      %16 = arith.addf %15, %14 : vector<16x32xf32>
      %c0_17 = arith.constant 0 : index
      %c0_18 = arith.constant 0 : index
      %17 = vector.load %arg8[%c0_17, %c0_18] : memref<16x32xf32, #tpu.memory_space<vmem>>, vector<16x32xf32>
      tpu.vector_store %arg8[%c0_17, %c0_18], %16 {strides = array<i32>} : memref<16x32xf32, #tpu.memory_space<vmem>>, vector<16x32xf32>,
    } else {
    }
    return
  }
  func.func @transform_0(%arg0: i32, %arg1: i32, %arg2: i32) -> (i32, i32) {
    %c0_i32 = arith.constant 0 : i32
    return %arg0, %arg2 : i32, i32
  }
  func.func @transform_1(%arg0: i32, %arg1: i32, %arg2: i32) -> (i32, i32) {
    %c0_i32 = arith.constant 0 : i32
    return %arg2, %arg1 : i32, i32
  }
  func.func @transform_2(%arg0: i32, %arg1: i32, %arg2: i32) -> (i32, i32) {
    %c0_i32 = arith.constant 0 : i32
    %c0_i32_0 = arith.constant 0 : i32
    return %arg0, %c0_i32 : i32, i32
  }
  func.func @transform_3(%arg0: i32, %arg1: i32, %arg2: i32) -> (i32, i32) {
    %c0_i32 = arith.constant 0 : i32
    %c0_i32_0 = arith.constant 0 : i32
    return %c0_i32, %arg1 : i32, i32
  }
  func.func @transform_4(%arg0: i32, %arg1: i32, %arg2: i32) -> (i32, i32) {
    %c0_i32 = arith.constant 0 : i32
    %c0_i32_0 = arith.constant 0 : i32
    return %c0_i32, %arg1 : i32, i32
  }
  func.func @transform_5(%arg0: i32, %arg1: i32, %arg2: i32) -> (i32, i32) {
    %c0_i32 = arith.constant 0 : i32
    return %arg0, %arg1 : i32, i32
  }
}

module attributes {stable_mosaic.version = 11 : i64} {
  func.func @_reslora_kernel(%arg0: i32, %arg1: i32, %arg2: i32, %arg3: memref<16x32xf32, #tpu.memory_space<vmem>>, %arg4: memref<32x32xf32, #tpu.memory_space<vmem>>, %arg5: memref<16x4xf32, #tpu.memory_space<vmem>>, %arg6: memref<4x32xf32, #tpu.memory_space<vmem>>, %arg7: memref<1x32xf32, #tpu.memory_space<vmem>>, %arg8: memref<16x32xf32, #tpu.memory_space<vmem>>, %arg9: memref<16x32xf32, #tpu.memory_space<vmem>>) attributes {dimension_semantics = [#tpu.dimension_semantics<parallel>, #tpu.dimension_semantics<parallel>, #tpu.dimension_semantics<arbitrary>], iteration_bounds = array<i64: 1, 1, 1>, scalar_prefetch = 0 : i64, scratch_operands = 1 : i64, tpu.core_type = #tpu.core_type<tc>, window_params = [{transform_indices = @transform_0, window_bounds = array<i64: 16, 32>}, {transform_indices = @transform_1, window_bounds = array<i64: 32, 32>}, {transform_indices = @transform_2, window_bounds = array<i64: 16, 4>}, {transform_indices = @transform_3, window_bounds = array<i64: 4, 32>}, {transform_indices = @transform_4, window_bounds = array<i64: 1, 32>}, {transform_indices = @transform_5, window_bounds = array<i64: 16, 32>}]} {
    %c0_i32 = arith.constant 0 : i32
    %0 = arith.cmpi eq, %arg2, %c0_i32 : i32
    %1 = arith.extui %0 : i1 to i32
    %c0_i32_0 = arith.constant 0 : i32
    %2 = arith.cmpi ne, %1, %c0_i32_0 : i32
    scf.if %2 {
      %c0_10 = arith.constant 0 : index
      %c0_11 = arith.constant 0 : index
      %12 = vector.load %arg7[%c0_10, %c0_11] : memref<1x32xf32, #tpu.memory_space<vmem>>, vector<1x32xf32>
      %13 = vector.shape_cast %12 : vector<1x32xf32> to vector<1x32xf32>
      %14 = vector.broadcast %13 : vector<1x32xf32> to vector<16x32xf32>
      %c0_12 = arith.constant 0 : index
      %c0_13 = arith.constant 0 : index
      %15 = vector.load %arg9[%c0_12, %c0_13] : memref<16x32xf32, #tpu.memory_space<vmem>>, vector<16x32xf32>
      tpu.vector_store %arg9[%c0_12, %c0_13], %14 {strides = array<i32>} : memref<16x32xf32, #tpu.memory_space<vmem>>, vector<16x32xf32>,
    } else {
    }
    %c0 = arith.constant 0 : index
    %c0_1 = arith.constant 0 : index
    %3 = vector.load %arg9[%c0, %c0_1] : memref<16x32xf32, #tpu.memory_space<vmem>>, vector<16x32xf32>
    %c0_2 = arith.constant 0 : index
    %c0_3 = arith.constant 0 : index
    %4 = vector.load %arg3[%c0_2, %c0_3] : memref<16x32xf32, #tpu.memory_space<vmem>>, vector<16x32xf32>
    %c0_4 = arith.constant 0 : index
    %c0_5 = arith.constant 0 : index
    %5 = vector.load %arg4[%c0_4, %c0_5] : memref<32x32xf32, #tpu.memory_space<vmem>>, vector<32x32xf32>
    %cst = arith.constant dense<0.000000e+00> : vector<16x32xf32>
    %6 = tpu.matmul %4, %5, %cst {dimension_numbers = #tpu.dot_dimension_numbers<[1], [0], [0], [1], [0, 0, 1, 1], [], []>} : vector<16x32xf32>, vector<32x32xf32>, vector<16x32xf32> -> vector<16x32xf32>
    %7 = arith.addf %3, %6 : vector<16x32xf32>
    %c0_6 = arith.constant 0 : index
    %c0_7 = arith.constant 0 : index
    %8 = vector.load %arg9[%c0_6, %c0_7] : memref<16x32xf32, #tpu.memory_space<vmem>>, vector<16x32xf32>
    tpu.vector_store %arg9[%c0_6, %c0_7], %7 {strides = array<i32>} : memref<16x32xf32, #tpu.memory_space<vmem>>, vector<16x32xf32>,
    %c0_i32_8 = arith.constant 0 : i32
    %9 = arith.cmpi eq, %arg2, %c0_i32_8 : i32
    %10 = arith.extui %9 : i1 to i32
    %c0_i32_9 = arith.constant 0 : i32
    %11 = arith.cmpi ne, %10, %c0_i32_9 : i32
    scf.if %11 {
      %c0_10 = arith.constant 0 : index
      %c0_11 = arith.constant 0 : index
      %12 = vector.load %arg5[%c0_10, %c0_11] : memref<16x4xf32, #tpu.memory_space<vmem>>, vector<16x4xf32>
      %c0_12 = arith.constant 0 : index
      %c0_13 = arith.constant 0 : index
      %13 = vector.load %arg6[%c0_12, %c0_13] : memref<4x32xf32, #tpu.memory_space<vmem>>, vector<4x32xf32>
      %cst_14 = arith.constant dense<0.000000e+00> : vector<16x32xf32>
      %14 = tpu.matmul %12, %13, %cst_14 {dimension_numbers = #tpu.dot_dimension_numbers<[1], [0], [0], [1], [0, 0, 1, 1], [], []>} : vector<16x4xf32>, vector<4x32xf32>, vector<16x32xf32> -> vector<16x32xf32>
      %c0_15 = arith.constant 0 : index
      %c0_16 = arith.constant 0 : index
      %15 = vector.load %arg9[%c0_15, %c0_16] : memref<16x32xf32, #tpu.memory_space<vmem>>, vector<16x32xf32>
      %16 = arith.addf %15, %14 : vector<16x32xf32>
      %c0_17 = arith.constant 0 : index
      %c0_18 = arith.constant 0 : index
      %17 = vector.load %arg8[%c0_17, %c0_18] : memref<16x32xf32, #tpu.memory_space<vmem>>, vector<16x32xf32>
      tpu.vector_store %arg8[%c0_17, %c0_18], %16 {strides = array<i32>} : memref<16x32xf32, #tpu.memory_space<vmem>>, vector<16x32xf32>,
    } else {
    }
    return
  }
  func.func @transform_0(%arg0: i32, %arg1: i32, %arg2: i32) -> (i32, i32) {
    %c0_i32 = arith.constant 0 : i32
    return %arg0, %arg2 : i32, i32
  }
  func.func @transform_1(%arg0: i32, %arg1: i32, %arg2: i32) -> (i32, i32) {
    %c0_i32 = arith.constant 0 : i32
    return %arg2, %arg1 : i32, i32
  }
  func.func @transform_2(%arg0: i32, %arg1: i32, %arg2: i32) -> (i32, i32) {
    %c0_i32 = arith.constant 0 : i32
    %c0_i32_0 = arith.constant 0 : i32
    return %arg0, %c0_i32 : i32, i32
  }
  func.func @transform_3(%arg0: i32, %arg1: i32, %arg2: i32) -> (i32, i32) {
    %c0_i32 = arith.constant 0 : i32
    %c0_i32_0 = arith.constant 0 : i32
    return %c0_i32, %arg1 : i32, i32
  }
  func.func @transform_4(%arg0: i32, %arg1: i32, %arg2: i32) -> (i32, i32) {
    %c0_i32 = arith.constant 0 : i32
    %c0_i32_0 = arith.constant 0 : i32
    return %c0_i32, %arg1 : i32, i32
  }
  func.func @transform_5(%arg0: i32, %arg1: i32, %arg2: i32) -> (i32, i32) {
    %c0_i32 = arith.constant 0 : i32
    return %arg0, %arg1 : i32, i32
  }
}

</mosaic_0001>

<llo_original>
// kernel: two_layer_chain.3
$region0: #{two_layer_chain.3}
  #allocation0 [shape = 'u32[]', space=smem, size = 0x4, offset = 0x4, fixed_abs, tag = 'smem constant byte address 0x4 - core index']
  #allocation1 [shape = 'u32[72,128]{1,0:T(1,128)}', space=vmem, size = 0x9000, scoped, tag = 'internal scratch']
  #allocation2 [shape = 'f32[16,32]{1,0:T(8,128)}', space=vmem, size = 0x2000, scoped, tag = 'scratch operand']
  %s0 = inlined_call_operand.vmem [shape: f32[16,32], index: 0, kind: input, shape index: {}]
  %s1 = inlined_call_operand.vmem [shape: f32[32,32], index: 1, kind: input, shape index: {}]
  %s2 = inlined_call_operand.vmem [shape: f32[16,8], index: 2, kind: input, shape index: {}]
  %s3 = inlined_call_operand.vmem [shape: f32[8,32], index: 3, kind: input, shape index: {}]
  %s4 = inlined_call_operand.vmem [shape: f32[1,32], index: 4, kind: input, shape index: {}]
  %s5 = inlined_call_operand.hbm [shape: f32[16,32], index: 5, kind: output, shape index: {}]
  %s6 = sld [smem:[#allocation0]]
  $region38: #{two_layer_chain.3} parent=0
    _
  %s8 = ssub.s32 1, %s6
  %s9 = scalar_select 0, %s8, %s6
  $region1: #{two_layer_chain.3} parent=0
    #allocation3 [shape = 'u8[8192]{0}', space=vmem, size = 0x2000, scoped, tag = 'output window, operand 0, single buffered']
    #allocation4 [shape = 's32[1]{0}', space=sflag, size = 0x4, scoped, tag = 'scoped memory for two_layer_chain.3']
    %10 = vsyncpa [#allocation4], 0
    // Predicated region
    $region2: #{two_layer_chain.3} parent=1 // pred_check
      _
    $region3: #{two_layer_chain.3} parent=1 // pred_check_branch
      %12 = sbr.rel (0) target = $region5
    $region4: #{two_layer_chain.3} parent=1 // pred_region
      _
    $region5: #{two_layer_chain.3} parent=1 // pred_fallthru
      _
    // Predicated region
    $region6: #{two_layer_chain.3} parent=1 // pred_check
      _
    $region7: #{two_layer_chain.3} parent=1 // pred_check_branch
      %14 = sbr.rel (0) target = $region9
    $region8: #{two_layer_chain.3} parent=1 // pred_region
      _
    $region9: #{two_layer_chain.3} parent=1 // pred_fallthru
      _
    // Predicated region
    $region10: #{two_layer_chain.3} parent=1 // pred_check
      _
    $region11: #{two_layer_chain.3} parent=1 // pred_check_branch
      %16 = sbr.rel (0) target = $region13
    $region12: #{two_layer_chain.3} parent=1 // pred_region
      _
    $region13: #{two_layer_chain.3} parent=1 // pred_fallthru
      _
    // Predicated region
    $region14: #{two_layer_chain.3} parent=1 // pred_check
      _
    $region15: #{two_layer_chain.3} parent=1 // pred_check_branch
      %18 = sbr.rel (0) target = $region17
    $region16: #{two_layer_chain.3} parent=1 // pred_region
      _
    $region17: #{two_layer_chain.3} parent=1 // pred_fallthru
      _
    // Predicated region
    $region18: #{two_layer_chain.3} parent=1 // pred_check
      _
    $region19: #{two_layer_chain.3} parent=1 // pred_check_branch
      %20 = sbr.rel (0) target = $region21
    $region20: #{two_layer_chain.3} parent=1 // pred_region
      _
    $region21: #{two_layer_chain.3} parent=1 // pred_fallthru
      _
    %p21 = scmp.eq.s32.totalorder 0, 0
    // Predicated region
    $region22: #{two_layer_chain.3} parent=1 // pred_check
      %p22 = pneg %p21
    $region23: #{two_layer_chain.3} parent=1 // pred_check_branch
      %24 = sbr.rel (%p22) target = $region25
    $region24: #{two_layer_chain.3} parent=1 // pred_region
      %v25 = vld [vmem:[%s4] sm:$0x1]
      %v27 = vperm.slane %v25, 0
      %vm29 = vcmask 261120
      %30 = vst.msk [vmem:[#allocation2] sm:$0xff] %vm29, %v27
      %31 = vst.msk [vmem:[#allocation2 + $0x8] sm:$0xff] %vm29, %v27
    $region25: #{two_layer_chain.3} parent=1 // pred_fallthru
      _
    %v32 = vld [vmem:[#allocation2] sm:$0xff]
    %v33 = vld [vmem:[#allocation2 + $0x8] sm:$0xff]
    %v34 = vld [vmem:[%s0] sm:$0xff]
    %v35 = vld [vmem:[%s0 + $0x8] sm:$0xff]
    %v36 = vld [vmem:[%s1] sm:$0xff]
    %v37 = vld [vmem:[%s1 + $0x8] sm:$0xff]
    %v38 = vld [vmem:[%s1 + $0x10] sm:$0xff]
    %v39 = vld [vmem:[%s1 + $0x18] sm:$0xff]
    %vm40 = vcmask 261120
    %v42 = vsel %vm40, %v34, 0
    %v45 = vsel %vm40, %v35, 0
    %47 = vmatpush.msra.mxu0 0.0
    %48 = vmatpush.msra.mxu0 0.0
    %49 = vmatpush.msra.mxu0 0.0
    %50 = vmatpush.msra.mxu0 0.0
    %51 = vmatpush.msra.mxu0 0.0
    %52 = vmatpush.msra.mxu0 0.0
    %53 = vmatpush.msra.mxu0 0.0
    %54 = vmatpush.msra.mxu0 0.0
    %55 = vmatpush.msra.mxu0 0.0
    %56 = vmatpush.msra.mxu0 0.0
    %57 = vmatpush.msra.mxu0 0.0
    %58 = vmatpush.msra.mxu0 0.0
    %59 = vmatpush.msra.mxu0 %v39
    %60 = vmatpush.msra.mxu0 %v38
    %61 = vmatpush.msra.mxu0 %v37
    %62 = vmatpush.msra.mxu0 %v36
    %63 = vmatmul.f32.gmra.mxu0 %v42
    %v64 = vpop.f32.mrf.mxu0
    %v65 = vadd.f32 0.0, %v64
    %66 = vmatmul.f32.gmra.mxu0 %v45
    %v67 = vpop.f32.mrf.mxu0
    %v68 = vadd.f32 0.0, %v67
    %69 = vdwg.mxu0
    %v70 = vadd.f32 %v32, %v65
    %v71 = vadd.f32 %v33, %v68
    %72 = vst.msk [vmem:[#allocation2] sm:$0xff] %vm40, %v70
    %73 = vst.msk [vmem:[#allocation2 + $0x8] sm:$0xff] %vm40, %v71
    // Predicated region
    $region26: #{two_layer_chain.3} parent=1 // pred_check
      %p74 = pneg %p21
    $region27: #{two_layer_chain.3} parent=1 // pred_check_branch
      %76 = sbr.rel (%p74) target = $region29
    $region28: #{two_layer_chain.3} parent=1 // pred_region
      %v77 = vld [vmem:[%s2] sm:$0xff]
      %v78 = vld [vmem:[%s2 + $0x8] sm:$0xff]
      %v79 = vld [vmem:[%s3] sm:$0xff]
      %vm80 = vcmask 64512
      %v82 = vsel %vm80, %v77, 0
      %v85 = vsel %vm80, %v78, 0
      %87 = vmatpush.msra.mxu0 0.0
      %88 = vmatpush.msra.mxu0 0.0
      %89 = vmatpush.msra.mxu0 0.0
      %90 = vmatpush.msra.mxu0 0.0
      %91 = vmatpush.msra.mxu0 0.0
      %92 = vmatpush.msra.mxu0 0.0
      %93 = vmatpush.msra.mxu0 0.0
      %94 = vmatpush.msra.mxu0 0.0
      %95 = vmatpush.msra.mxu0 0.0
      %96 = vmatpush.msra.mxu0 0.0
      %97 = vmatpush.msra.mxu0 0.0
      %98 = vmatpush.msra.mxu0 0.0
      %99 = vmatpush.msra.mxu0 0.0
      %100 = vmatpush.msra.mxu0 0.0
      %101 = vmatpush.msra.mxu0 0.0
      %102 = vmatpush.msra.mxu0 %v79
      %103 = vmatmul.f32.gmra.mxu0 %v82
      %v104 = vpop.f32.mrf.mxu0
      %v105 = vadd.f32 0.0, %v104
      %106 = vmatmul.f32.gmra.mxu0 %v85
      %v107 = vpop.f32.mrf.mxu0
      %v108 = vadd.f32 0.0, %v107
      %109 = vdwg.mxu0
      %v110 = vld [vmem:[#allocation2] sm:$0xff]
      %v111 = vld [vmem:[#allocation2 + $0x8] sm:$0xff]
      %v112 = vadd.f32 %v110, %v105
      %v113 = vadd.f32 %v111, %v108
      %114 = vst.msk [vmem:[#allocation3] sm:$0xff] %vm40, %v112
      %115 = vst.msk [vmem:[#allocation3 + $0x8] sm:$0xff] %vm40, %v113
    $region29: #{two_layer_chain.3} parent=1 // pred_fallthru
      _
    // Predicated region
    $region30: #{two_layer_chain.3} parent=1 // pred_check
      _
    $region31: #{two_layer_chain.3} parent=1 // pred_check_branch
      %117 = sbr.rel (0) target = $region33
    $region32: #{two_layer_chain.3} parent=1 // pred_region
      %119 = vsyncadd [#allocation4], 0
      %s120 = sshll.u32 [#allocation3], 4
      %s121 = int_to_ptr.vmem [resolvable:$true] %s120
      %s122 = sshll.u32 %s5, 4
      %s123 = int_to_ptr.hbm [resolvable:$true] %s122
      %128 = dma.vmem_to_hbm [thread:$0]  %s121, 256, %s123, [#allocation4], 128, 128, 8
    $region33: #{two_layer_chain.3} parent=1 // pred_fallthru
      _
    // Predicated region
    $region34: #{two_layer_chain.3} parent=1 // pred_check
      _
    $region35: #{two_layer_chain.3} parent=1 // pred_check_branch
      %130 = sbr.rel (0) target = $region37
    $region36: #{two_layer_chain.3} parent=1 // pred_region
      %132 = dma.done [#allocation4], 256
    $region37: #{two_layer_chain.3} parent=1 // pred_fallthru
      _
    %133 = vsyncpa [#allocation4], 1

// kernel: two_layer_chain.2
$region0: #{two_layer_chain.2}
  #allocation0 [shape = 'u32[]', space=smem, size = 0x4, offset = 0x4, fixed_abs, tag = 'smem constant byte address 0x4 - core index']
  #allocation1 [shape = 'u32[72,128]{1,0:T(1,128)}', space=vmem, size = 0x9000, scoped, tag = 'internal scratch']
  #allocation2 [shape = 'f32[16,32]{1,0:T(8,128)}', space=vmem, size = 0x2000, scoped, tag = 'scratch operand']
  %s0 = inlined_call_operand.vmem [shape: f32[16,32], index: 0, kind: input, shape index: {}]
  %s1 = inlined_call_operand.vmem [shape: f32[32,32], index: 1, kind: input, shape index: {}]
  %s2 = inlined_call_operand.vmem [shape: f32[16,4], index: 2, kind: input, shape index: {}]
  %s3 = inlined_call_operand.vmem [shape: f32[4,32], index: 3, kind: input, shape index: {}]
  %s4 = inlined_call_operand.vmem [shape: f32[1,32], index: 4, kind: input, shape index: {}]
  %s5 = inlined_call_operand.vmem [shape: f32[16,32], index: 5, kind: output, shape index: {}]
  %s6 = sld [smem:[#allocation0]]
  $region38: #{two_layer_chain.2} parent=0
    _
  %s8 = ssub.s32 1, %s6
  %s9 = scalar_select 0, %s8, %s6
  // Predicated region
  $region2: #{two_layer_chain.2} parent=0 // pred_check
    _
  $region3: #{two_layer_chain.2} parent=0 // pred_check_branch
    %11 = sbr.rel (0) target = $region5
  $region4: #{two_layer_chain.2} parent=0 // pred_region
    _
  $region5: #{two_layer_chain.2} parent=0 // pred_fallthru
    _
  // Predicated region
  $region6: #{two_layer_chain.2} parent=0 // pred_check
    _
  $region7: #{two_layer_chain.2} parent=0 // pred_check_branch
    %13 = sbr.rel (0) target = $region9
  $region8: #{two_layer_chain.2} parent=0 // pred_region
    _
  $region9: #{two_layer_chain.2} parent=0 // pred_fallthru
    _
  // Predicated region
  $region10: #{two_layer_chain.2} parent=0 // pred_check
    _
  $region11: #{two_layer_chain.2} parent=0 // pred_check_branch
    %15 = sbr.rel (0) target = $region13
  $region12: #{two_layer_chain.2} parent=0 // pred_region
    _
  $region13: #{two_layer_chain.2} parent=0 // pred_fallthru
    _
  // Predicated region
  $region14: #{two_layer_chain.2} parent=0 // pred_check
    _
  $region15: #{two_layer_chain.2} parent=0 // pred_check_branch
    %17 = sbr.rel (0) target = $region17
  $region16: #{two_layer_chain.2} parent=0 // pred_region
    _
  $region17: #{two_layer_chain.2} parent=0 // pred_fallthru
    _
  // Predicated region
  $region18: #{two_layer_chain.2} parent=0 // pred_check
    _
  $region19: #{two_layer_chain.2} parent=0 // pred_check_branch
    %19 = sbr.rel (0) target = $region21
  $region20: #{two_layer_chain.2} parent=0 // pred_region
    _
  $region21: #{two_layer_chain.2} parent=0 // pred_fallthru
    _
  %p20 = scmp.eq.s32.totalorder 0, 0
  // Predicated region
  $region22: #{two_layer_chain.2} parent=0 // pred_check
    %p21 = pneg %p20
  $region23: #{two_layer_chain.2} parent=0 // pred_check_branch
    %23 = sbr.rel (%p21) target = $region25
  $region24: #{two_layer_chain.2} parent=0 // pred_region
    %v24 = vld [vmem:[%s4] sm:$0x1]
    %v26 = vperm.slane %v24, 0
    %vm28 = vcmask 261120
    %29 = vst.msk [vmem:[#allocation2] sm:$0xff] %vm28, %v26
    %30 = vst.msk [vmem:[#allocation2 + $0x8] sm:$0xff] %vm28, %v26
  $region25: #{two_layer_chain.2} parent=0 // pred_fallthru
    _
  %v31 = vld [vmem:[#allocation2] sm:$0xff]
  %v32 = vld [vmem:[#allocation2 + $0x8] sm:$0xff]
  %v33 = vld [vmem:[%s0] sm:$0xff]
  %v34 = vld [vmem:[%s0 + $0x8] sm:$0xff]
  %v35 = vld [vmem:[%s1] sm:$0xff]
  %v36 = vld [vmem:[%s1 + $0x8] sm:$0xff]
  %v37 = vld [vmem:[%s1 + $0x10] sm:$0xff]
  %v38 = vld [vmem:[%s1 + $0x18] sm:$0xff]
  %vm39 = vcmask 261120
  %v41 = vsel %vm39, %v33, 0
  %v44 = vsel %vm39, %v34, 0
  %46 = vmatpush.msra.mxu0 0.0
  %47 = vmatpush.msra.mxu0 0.0
  %48 = vmatpush.msra.mxu0 0.0
  %49 = vmatpush.msra.mxu0 0.0
  %50 = vmatpush.msra.mxu0 0.0
  %51 = vmatpush.msra.mxu0 0.0
  %52 = vmatpush.msra.mxu0 0.0
  %53 = vmatpush.msra.mxu0 0.0
  %54 = vmatpush.msra.mxu0 0.0
  %55 = vmatpush.msra.mxu0 0.0
  %56 = vmatpush.msra.mxu0 0.0
  %57 = vmatpush.msra.mxu0 0.0
  %58 = vmatpush.msra.mxu0 %v38
  %59 = vmatpush.msra.mxu0 %v37
  %60 = vmatpush.msra.mxu0 %v36
  %61 = vmatpush.msra.mxu0 %v35
  %62 = vmatmul.f32.gmra.mxu0 %v41
  %v63 = vpop.f32.mrf.mxu0
  %v64 = vadd.f32 0.0, %v63
  %65 = vmatmul.f32.gmra.mxu0 %v44
  %v66 = vpop.f32.mrf.mxu0
  %v67 = vadd.f32 0.0, %v66
  %68 = vdwg.mxu0
  %v69 = vadd.f32 %v31, %v64
  %v70 = vadd.f32 %v32, %v67
  %71 = vst.msk [vmem:[#allocation2] sm:$0xff] %vm39, %v69
  %72 = vst.msk [vmem:[#allocation2 + $0x8] sm:$0xff] %vm39, %v70
  // Predicated region
  $region26: #{two_layer_chain.2} parent=0 // pred_check
    %p73 = pneg %p20
  $region27: #{two_layer_chain.2} parent=0 // pred_check_branch
    %75 = sbr.rel (%p73) target = $region29
  $region28: #{two_layer_chain.2} parent=0 // pred_region
    %v76 = vld [vmem:[%s2] sm:$0xff]
    %v77 = vld [vmem:[%s2 + $0x8] sm:$0xff]
    %v78 = vld [vmem:[%s3] sm:$0xf]
    %vm79 = vcmask 31744
    %v81 = vsel %vm79, %v76, 0
    %v84 = vsel %vm79, %v77, 0
    %vm86 = vcmask 1043456
    %v88 = vsel %vm86, %v78, 0
    %90 = vmatpush.msra.mxu0 0.0
    %91 = vmatpush.msra.mxu0 0.0
    %92 = vmatpush.msra.mxu0 0.0
    %93 = vmatpush.msra.mxu0 0.0
    %94 = vmatpush.msra.mxu0 0.0
    %95 = vmatpush.msra.mxu0 0.0
    %96 = vmatpush.msra.mxu0 0.0
    %97 = vmatpush.msra.mxu0 0.0
    %98 = vmatpush.msra.mxu0 0.0
    %99 = vmatpush.msra.mxu0 0.0
    %100 = vmatpush.msra.mxu0 0.0
    %101 = vmatpush.msra.mxu0 0.0
    %102 = vmatpush.msra.mxu0 0.0
    %103 = vmatpush.msra.mxu0 0.0
    %104 = vmatpush.msra.mxu0 0.0
    %105 = vmatpush.msra.mxu0 %v88
    %106 = vmatmul.f32.gmra.mxu0 %v81
    %v107 = vpop.f32.mrf.mxu0
    %v108 = vadd.f32 0.0, %v107
    %109 = vmatmul.f32.gmra.mxu0 %v84
    %v110 = vpop.f32.mrf.mxu0
    %v111 = vadd.f32 0.0, %v110
    %112 = vdwg.mxu0
    %v113 = vld [vmem:[#allocation2] sm:$0xff]
    %v114 = vld [vmem:[#allocation2 + $0x8] sm:$0xff]
    %v115 = vadd.f32 %v113, %v108
    %v116 = vadd.f32 %v114, %v111
    %117 = vst.msk [vmem:[%s5] sm:$0xff] %vm39, %v115
    %118 = vst.msk [vmem:[%s5 + $0x8] sm:$0xff] %vm39, %v116
  $region29: #{two_layer_chain.2} parent=0 // pred_fallthru
    _
  // Predicated region
  $region30: #{two_layer_chain.2} parent=0 // pred_check
    _
  $region31: #{two_layer_chain.2} parent=0 // pred_check_branch
    %120 = sbr.rel (0) target = $region33
  $region32: #{two_layer_chain.2} parent=0 // pred_region
    _
  $region33: #{two_layer_chain.2} parent=0 // pred_fallthru
    _
  // Predicated region
  $region34: #{two_layer_chain.2} parent=0 // pred_check
    _
  $region35: #{two_layer_chain.2} parent=0 // pred_check_branch
    %122 = sbr.rel (0) target = $region37
  $region36: #{two_layer_chain.2} parent=0 // pred_region
    _
  $region37: #{two_layer_chain.2} parent=0 // pred_fallthru
    _

</llo_original>
